<compile_context>
chip_gen: v7x
topology: tpu7x:2x2x1
jax: 0.10.0
libtpu: 0.0.40
codegen_flags: <defaults>
</compile_context>

<pallas_src>
import jax
import jax.numpy as jnp
from jax.experimental import pallas as pl
from jax.experimental.pallas import tpu as pltpu

EPS = 1e-06      # module-level EPS used inside the log-det term
BN_EPS = 1e-05   # self.eps added to the batch variance

LANE = 128
_VMEM_STEP_BUDGET = 24 * 1024 * 1024   # per-grid-step footprint target (fits v7x 64 MiB/TC)
_VMEM_LIMIT_FLOOR = 32 * 1024 * 1024   # above v5e's 16 MiB / v6e's 32 MiB defaults
_VMEM_LIMIT_CAP = 48 * 1024 * 1024     # safe headroom on every generation


def _bnflow_kernel(x_ref, lg_ref, beta_ref, y_ref, ld_ref):
    # One (B, TILE_D) feature tile. Stats over the batch axis are exact
    # because B is never tiled. All math is strictly per-column, so garbage
    # in out-of-bounds lanes of a ragged last block never contaminates valid
    # columns, and its y / logdet results are dropped by the masked store.
    x = x_ref[...].astype(jnp.float32)           # (B, TILE_D) f32 working copy
    lg = lg_ref[...]                             # (1, TILE_D) f32
    beta = beta_ref[...]                         # (1, TILE_D) f32

    mean = jnp.mean(x, axis=0, keepdims=True)                          # (1, TILE_D)
    var = jnp.mean((x - mean) ** 2, axis=0, keepdims=True) + BN_EPS    # (1, TILE_D)

    inv_std = jax.lax.rsqrt(var)                 # EUP
    scale = jnp.exp(lg) * inv_std                # (1, TILE_D)
    shift = beta - mean * scale                  # (1, TILE_D)

    # Per-element: one mul + one add on the VPU.
    y_ref[...] = (x * scale + shift).astype(y_ref.dtype)

    # Per-feature log-det contribution (lane-dense row, summed in the wrapper).
    # Keep the explicit log(var + EPS): the module adds EPS on top of the eps
    # already folded into var, so log(inv_std) alone would not be exact.
    ld_ref[...] = lg - 0.5 * jnp.log(var + EPS)


def _choose_tiling(B, D, x_dtype):
    """Pick a lane-dense feature-tile width from (B, x dtype, VMEM budget)."""
    if D <= LANE:
        # Full-dim block (always a legal BlockSpec), grid of 1; size is tiny.
        return D
    d_blocks = pl.cdiv(D, LANE)
    itemsize = jnp.dtype(x_dtype).itemsize
    # Per 128-lane block of the tile, per grid step:
    #   2 x double-buffered x in + 2 x double-buffered y out + f32 working copy.
    per_block = B * LANE * (2 * itemsize + 2 * itemsize + 4)
    max_blocks = max(1, _VMEM_STEP_BUDGET // per_block)
    # >=2 tiles so ("parallel",) shards across both v7x TensorCores (no-op on
    # v5e/v6e); aim for >=4 so each core still has steps to pipeline DMAs.
    target_tiles = 4 if d_blocks >= 4 else 2
    balanced = pl.cdiv(d_blocks, target_tiles)
    tile_blocks = max(1, min(max_blocks, balanced))
    # TODO(synk): for very large B even a single 128-lane block exceeds the
    # VMEM budget; a two-phase (sum/sumsq accumulate, then re-sweep) structure
    # over a tiled B axis would bound VMEM there.
    return tile_blocks * LANE


def batch_norm_flow_direct(x, log_gamma, beta):
    """Direct-mode, training-stats forward of BatchNormFlow.

    x:         (B, D) float32 or bfloat16
    log_gamma: (D,)   float
    beta:      (D,)   float
    returns:   y (B, D) with x's dtype, logdet (1,) float32
    """
    B, D = x.shape
    tile_d = _choose_tiling(B, D, x.dtype)
    num_tiles = pl.cdiv(D, tile_d)

    # Parameters as (1, D) f32 rows (no feature-axis padding anywhere).
    lg2 = log_gamma.reshape(1, D).astype(jnp.float32)
    bt2 = beta.reshape(1, D).astype(jnp.float32)

    itemsize = jnp.dtype(x.dtype).itemsize
    step_bytes = B * tile_d * (4 * itemsize + 4) + 8 * tile_d * 4  # x/y bufs + f32 copy + rows
    vmem_limit = int(min(_VMEM_LIMIT_CAP, max(_VMEM_LIMIT_FLOOR, step_bytes + (2 << 20))))

    y, ld_row = pl.pallas_call(
        _bnflow_kernel,
        out_shape=(
            jax.ShapeDtypeStruct((B, D), x.dtype),        # y, exact shape (masked edge store)
            jax.ShapeDtypeStruct((1, D), jnp.float32),    # per-feature logdet row
        ),
        grid=(num_tiles,),
        in_specs=[
            pl.BlockSpec((B, tile_d), lambda j: (0, j)),   # x (native dtype DMA)
            pl.BlockSpec((1, tile_d), lambda j: (0, j)),   # log_gamma
            pl.BlockSpec((1, tile_d), lambda j: (0, j)),   # beta
        ],
        out_specs=(
            pl.BlockSpec((B, tile_d), lambda j: (0, j)),
            pl.BlockSpec((1, tile_d), lambda j: (0, j)),
        ),
        compiler_params=pltpu.CompilerParams(
            dimension_semantics=("parallel",),             # megacore sharding on v7x
            vmem_limit_bytes=vmem_limit,
        ),
    )(x, lg2, bt2)

    # ld_row is exactly (1, D): out-of-bounds lanes of the ragged last block
    # were never written, so no slicing is needed before the reduction.
    logdet = jnp.sum(ld_row).reshape(1)
    # TODO(synk): running_mean/running_var buffer updates are stateful side
    # effects (with momentum=0 they simply equal the batch stats) and are not
    # part of the kernel's returned outputs.
    return y, logdet


def _reference(x, log_gamma, beta):
    xf = x.astype(jnp.float32)
    mean = xf.mean(0)
    var = ((xf - mean) ** 2).mean(0) + BN_EPS
    x_hat = (xf - mean) / jnp.sqrt(var)
    y = jnp.exp(log_gamma) * x_hat + beta
    logdet = jnp.sum(log_gamma - 0.5 * jnp.log(var + EPS), keepdims=True)
    return y.astype(x.dtype), logdet


if __name__ == "__main__":
    keys = jax.random.split(jax.random.PRNGKey(0), 8)

    # Case 1: small module-like shape (num_inputs=32) -> single full-dim tile.
    B1, D1 = 8, 32
    x1 = jax.random.normal(keys[0], (B1, D1), dtype=jnp.float32) * 2.0 + 0.5
    lg1 = jnp.zeros((D1,), dtype=jnp.float32)   # params exactly as in __init__
    bt1 = jnp.zeros((D1,), dtype=jnp.float32)

    y1, ld1 = batch_norm_flow_direct(x1, lg1, bt1)
    jax.block_until_ready((y1, ld1))
    y1_ref, ld1_ref = _reference(x1, lg1, bt1)
    assert y1.shape == (B1, D1) and ld1.shape == (1,)
    assert jnp.allclose(y1, y1_ref, atol=1e-5, rtol=1e-5)
    assert jnp.allclose(ld1, ld1_ref, atol=1e-5, rtol=1e-5)

    # Case 2: larger feature dim exercising the multi-tile grid (D=2560 ->
    # 4 tiles of 640 lanes) with non-trivial parameters, float32.
    B2, D2 = 8, 2560
    x2 = jax.random.normal(keys[1], (B2, D2), dtype=jnp.float32)
    lg2 = 0.1 * jax.random.normal(keys[2], (D2,), dtype=jnp.float32)
    bt2 = 0.1 * jax.random.normal(keys[3], (D2,), dtype=jnp.float32)

    y2, ld2 = batch_norm_flow_direct(x2, lg2, bt2)
    jax.block_until_ready((y2, ld2))
    y2_ref, ld2_ref = _reference(x2, lg2, bt2)
    assert y2.shape == (B2, D2)
    assert jnp.allclose(y2, y2_ref, atol=1e-5, rtol=1e-5)
    assert jnp.allclose(ld2, ld2_ref, atol=1e-4, rtol=1e-5)

    # Case 3: bf16 activations + non-128-aligned D (D=300 -> 2 tiles of 256,
    # ragged last block with masked stores; no wrapper-side pad or slice).
    B3, D3 = 16, 300
    x3 = (jax.random.normal(keys[4], (B3, D3), dtype=jnp.float32) * 1.5
          + 0.25).astype(jnp.bfloat16)
    lg3 = 0.05 * jax.random.normal(keys[5], (D3,), dtype=jnp.float32)
    bt3 = 0.05 * jax.random.normal(keys[6], (D3,), dtype=jnp.float32)

    y3, ld3 = batch_norm_flow_direct(x3, lg3, bt3)
    jax.block_until_ready((y3, ld3))
    y3_ref, ld3_ref = _reference(x3, lg3, bt3)
    assert y3.shape == (B3, D3) and y3.dtype == jnp.bfloat16
    assert jnp.allclose(y3.astype(jnp.float32), y3_ref.astype(jnp.float32),
                        atol=2e-2, rtol=2e-2)
    assert jnp.allclose(ld3, ld3_ref, atol=1e-4, rtol=1e-5)

    print("KERNEL_OK")
</pallas_src>

<mosaic_0001>
module attributes {stable_mosaic.version = 11 : i64} {
  func.func @_bnflow_kernel(%arg0: i32, %arg1: memref<8x32xf32, #tpu.memory_space<vmem>>, %arg2: memref<1x32xf32, #tpu.memory_space<vmem>>, %arg3: memref<1x32xf32, #tpu.memory_space<vmem>>, %arg4: memref<8x32xf32, #tpu.memory_space<vmem>>, %arg5: memref<1x32xf32, #tpu.memory_space<vmem>>) attributes {dimension_semantics = [#tpu.dimension_semantics<parallel>], iteration_bounds = array<i64: 1>, scalar_prefetch = 0 : i64, scratch_operands = 0 : i64, tpu.core_type = #tpu.core_type<tc>, window_params = [{transform_indices = @transform_0, window_bounds = array<i64: 8, 32>}, {transform_indices = @transform_1, window_bounds = array<i64: 1, 32>}, {transform_indices = @transform_2, window_bounds = array<i64: 1, 32>}, {transform_indices = @transform_3, window_bounds = array<i64: 8, 32>}, {transform_indices = @transform_4, window_bounds = array<i64: 1, 32>}]} {
    %c0 = arith.constant 0 : index
    %c0_0 = arith.constant 0 : index
    %0 = vector.load %arg1[%c0, %c0_0] : memref<8x32xf32, #tpu.memory_space<vmem>>, vector<8x32xf32>
    %c0_1 = arith.constant 0 : index
    %c0_2 = arith.constant 0 : index
    %1 = vector.load %arg2[%c0_1, %c0_2] : memref<1x32xf32, #tpu.memory_space<vmem>>, vector<1x32xf32>
    %c0_3 = arith.constant 0 : index
    %c0_4 = arith.constant 0 : index
    %2 = vector.load %arg3[%c0_3, %c0_4] : memref<1x32xf32, #tpu.memory_space<vmem>>, vector<1x32xf32>
    %cst = arith.constant dense<0.000000e+00> : vector<32xf32>
    %3 = vector.multi_reduction <add>, %0, %cst [0] : vector<8x32xf32> to vector<32xf32>
    %4 = vector.shape_cast %3 : vector<32xf32> to vector<1x32xf32>
    %cst_5 = arith.constant 8.000000e+00 : f32
    %5 = vector.broadcast %cst_5 : f32 to vector<1x32xf32>
    %6 = arith.divf %4, %5 : vector<1x32xf32>
    %7 = vector.broadcast %6 : vector<1x32xf32> to vector<8x32xf32>
    %8 = arith.subf %0, %7 : vector<8x32xf32>
    %9 = arith.mulf %8, %8 : vector<8x32xf32>
    %cst_6 = arith.constant dense<0.000000e+00> : vector<32xf32>
    %10 = vector.multi_reduction <add>, %9, %cst_6 [0] : vector<8x32xf32> to vector<32xf32>
    %11 = vector.shape_cast %10 : vector<32xf32> to vector<1x32xf32>
    %cst_7 = arith.constant 8.000000e+00 : f32
    %12 = vector.broadcast %cst_7 : f32 to vector<1x32xf32>
    %13 = arith.divf %11, %12 : vector<1x32xf32>
    %cst_8 = arith.constant 9.99999974E-6 : f32
    %14 = vector.broadcast %cst_8 : f32 to vector<1x32xf32>
    %15 = arith.addf %13, %14 : vector<1x32xf32>
    %16 = math.rsqrt %15 : vector<1x32xf32>
    %17 = math.exp %1 : vector<1x32xf32>
    %18 = arith.mulf %17, %16 : vector<1x32xf32>
    %19 = arith.mulf %6, %18 : vector<1x32xf32>
    %20 = arith.subf %2, %19 : vector<1x32xf32>
    %21 = vector.broadcast %18 : vector<1x32xf32> to vector<8x32xf32>
    %22 = arith.mulf %0, %21 : vector<8x32xf32>
    %23 = vector.broadcast %20 : vector<1x32xf32> to vector<8x32xf32>
    %24 = arith.addf %22, %23 : vector<8x32xf32>
    %c0_9 = arith.constant 0 : index
    %c0_10 = arith.constant 0 : index
    %25 = vector.load %arg4[%c0_9, %c0_10] : memref<8x32xf32, #tpu.memory_space<vmem>>, vector<8x32xf32>
    tpu.vector_store %arg4[%c0_9, %c0_10], %24 {strides = array<i32>} : memref<8x32xf32, #tpu.memory_space<vmem>>, vector<8x32xf32>,
    %cst_11 = arith.constant 9.99999997E-7 : f32
    %26 = vector.broadcast %cst_11 : f32 to vector<1x32xf32>
    %27 = arith.addf %15, %26 : vector<1x32xf32>
    %28 = math.log %27 : vector<1x32xf32>
    %cst_12 = arith.constant 5.000000e-01 : f32
    %29 = vector.broadcast %cst_12 : f32 to vector<1x32xf32>
    %30 = arith.mulf %29, %28 : vector<1x32xf32>
    %31 = arith.subf %1, %30 : vector<1x32xf32>
    %c0_13 = arith.constant 0 : index
    %c0_14 = arith.constant 0 : index
    %32 = vector.load %arg5[%c0_13, %c0_14] : memref<1x32xf32, #tpu.memory_space<vmem>>, vector<1x32xf32>
    tpu.vector_store %arg5[%c0_13, %c0_14], %31 {strides = array<i32>} : memref<1x32xf32, #tpu.memory_space<vmem>>, vector<1x32xf32>,
    return
  }
  func.func @transform_0(%arg0: i32) -> (i32, i32) {
    %c0_i32 = arith.constant 0 : i32
    %c0_i32_0 = arith.constant 0 : i32
    return %c0_i32, %arg0 : i32, i32
  }
  func.func @transform_1(%arg0: i32) -> (i32, i32) {
    %c0_i32 = arith.constant 0 : i32
    %c0_i32_0 = arith.constant 0 : i32
    return %c0_i32, %arg0 : i32, i32
  }
  func.func @transform_2(%arg0: i32) -> (i32, i32) {
    %c0_i32 = arith.constant 0 : i32
    %c0_i32_0 = arith.constant 0 : i32
    return %c0_i32, %arg0 : i32, i32
  }
  func.func @transform_3(%arg0: i32) -> (i32, i32) {
    %c0_i32 = arith.constant 0 : i32
    %c0_i32_0 = arith.constant 0 : i32
    return %c0_i32, %arg0 : i32, i32
  }
  func.func @transform_4(%arg0: i32) -> (i32, i32) {
    %c0_i32 = arith.constant 0 : i32
    %c0_i32_0 = arith.constant 0 : i32
    return %c0_i32, %arg0 : i32, i32
  }
}

</mosaic_0001>

<llo_original>
// kernel: tpu_custom_call.1
$region0: #{tpu_custom_call.1}
  #allocation0 [shape = 'u32[]', space=smem, size = 0x4, offset = 0x4, fixed_abs, tag = 'smem constant byte address 0x4 - core index']
  #allocation1 [shape = 'u32[144,128]{1,0:T(1,128)}', space=vmem, size = 0x12000, scoped, tag = 'internal scratch']
  %s0 = inlined_call_operand.hbm [shape: f32[8,32], index: 0, kind: input, shape index: {}]
  %s1 = inlined_call_operand.vmem [shape: f32[1,32], index: 1, kind: input, shape index: {}]
  %s2 = inlined_call_operand.vmem [shape: f32[1,32], index: 2, kind: input, shape index: {}]
  %s3 = inlined_call_operand.hbm [shape: f32[8,32], index: 3, kind: output, shape index: {0}]
  %s4 = inlined_call_operand.hbm [shape: f32[1,32], index: 4, kind: output, shape index: {1}]
  %5 = xla_tuple %s3, %s4
  %s6 = sld [smem:[#allocation0]]
  $region34: #{tpu_custom_call.1} parent=0
    _
  %s8 = ssub.s32 1, %s6
  %s9 = scalar_select 0, %s8, %s6
  $region1: #{tpu_custom_call.1} parent=0
    #allocation2 [shape = 'u8[4096]{0}', space=vmem, size = 0x1000, scoped, tag = 'input window, operand 0, single buffered']
    #allocation3 [shape = 's32[1]{0}', space=sflag, size = 0x4, scoped, tag = 'scoped memory for tpu_custom_call.1']
    #allocation4 [shape = 's32[1]{0}', space=sflag, size = 0x4, scoped, tag = 'scoped memory for tpu_custom_call.1']
    #allocation5 [shape = 'u8[4096]{0}', space=vmem, size = 0x1000, scoped, tag = 'output window, operand 0, single buffered']
    #allocation6 [shape = 'u8[512]{0}', space=vmem, size = 0x400, scoped, tag = 'output window, operand 1, single buffered']
    #allocation7 [shape = 's32[1]{0}', space=sflag, size = 0x4, scoped, tag = 'scoped memory for tpu_custom_call.1']
    %10 = vsyncpa [#allocation3], 0
    %11 = vsyncpa [#allocation4], 0
    %12 = vsyncpa [#allocation7], 0
    // Predicated region
    $region2: #{tpu_custom_call.1} parent=1 // pred_check
      _
    $region3: #{tpu_custom_call.1} parent=1 // pred_check_branch
      %14 = sbr.rel (0) target = $region5
    $region4: #{tpu_custom_call.1} parent=1 // pred_region
      %s16 = ssub.s32 128, 128
      %17 = vsyncadd [#allocation3], %s16
      %s19 = sshll.u32 [#allocation2], 4
      %s20 = int_to_ptr.vmem [resolvable:$true] %s19
      %22 = dma.hbm_to_vmem [thread:$0]  %s0, 128, %s20, [#allocation3]
    $region5: #{tpu_custom_call.1} parent=1 // pred_fallthru
      _
    // Predicated region
    $region6: #{tpu_custom_call.1} parent=1 // pred_check
      _
    $region7: #{tpu_custom_call.1} parent=1 // pred_check_branch
      %24 = sbr.rel (0) target = $region9
    $region8: #{tpu_custom_call.1} parent=1 // pred_region
      _
    $region9: #{tpu_custom_call.1} parent=1 // pred_fallthru
      _
    // Predicated region
    $region10: #{tpu_custom_call.1} parent=1 // pred_check
      _
    $region11: #{tpu_custom_call.1} parent=1 // pred_check_branch
      %26 = sbr.rel (0) target = $region13
    $region12: #{tpu_custom_call.1} parent=1 // pred_region
      _
    $region13: #{tpu_custom_call.1} parent=1 // pred_fallthru
      _
    // Predicated region
    $region14: #{tpu_custom_call.1} parent=1 // pred_check
      _
    $region15: #{tpu_custom_call.1} parent=1 // pred_check_branch
      %28 = sbr.rel (0) target = $region17
    $region16: #{tpu_custom_call.1} parent=1 // pred_region
      %29 = dma.done [#allocation3], 128
    $region17: #{tpu_custom_call.1} parent=1 // pred_fallthru
      _
    %v30 = vld [vmem:[#allocation2] sm:$0xff]
    %v31 = vld [vmem:[%s1] sm:$0x1]
    %v32 = vld [vmem:[%s2] sm:$0x1]
    %vm33 = vcmask 261120
    %v34 = vsel %vm33, %v30, 0.0
    %v35 = vrot.slane %v34, 4
    %v36 = vadd.f32 %v34, %v35
    %v37 = vrot.slane %v36, 2
    %v38 = vadd.f32 %v36, %v37
    %v39 = vrot.slane %v38, 1
    %v40 = vadd.f32 %v38, %v39
    %v41 = vrcp.pop 8.0
    %v42 = vmul.f32 %v40, %v41
    %v43 = vsub.f32 %v30, %v42
    %v44 = vmul.f32 %v43, %v43
    %v45 = vsel %vm33, %v44, 0.0
    %v46 = vrot.slane %v45, 4
    %v47 = vadd.f32 %v45, %v46
    %v48 = vrot.slane %v47, 2
    %v49 = vadd.f32 %v47, %v48
    %v50 = vrot.slane %v49, 1
    %v51 = vadd.f32 %v49, %v50
    %v52 = vmul.f32 %v51, %v41
    %v53 = vadd.f32 %v52, 1e-05
    %v54 = vrsqrt.pop %v53
    %v55 = vmul.f32 %v31, 1.442695
    %v56 = vpow.pop %v55
    %v57 = vmul.f32 %v56, %v54
    %v58 = vmul.f32 %v42, %v57
    %v59 = vsub.f32 %v32, %v58
    %v61 = vlaneseq
    %v62 = vshrl.u32 %v61, 7
    %v63 = vsub.s32 0, %v62
    %v64 = vrot.slane %v57, %v63
    %v66 = vmul.f32 %v30, %v64
    %v68 = vlaneseq
    %v69 = vshrl.u32 %v68, 7
    %v70 = vsub.s32 0, %v69
    %v71 = vrot.slane %v59, %v70
    %v73 = vadd.f32 %v66, %v71
    %74 = vst.msk [vmem:[#allocation5] sm:$0xff] %vm33, %v73
    %v75 = vadd.f32 %v53, 1e-06
    %v76 = vlog2.pop %v75
    %v77 = vmul.f32 %v76, 0.6931472
    %v78 = vmul.f32 %v77, 0.5
    %v79 = vsub.f32 %v31, %v78
    %vm80 = vcmask 253952
    %81 = vst.msk [vmem:[#allocation6] sm:$0x1] %vm80, %v79
    // Predicated region
    $region18: #{tpu_custom_call.1} parent=1 // pred_check
      _
    $region19: #{tpu_custom_call.1} parent=1 // pred_check_branch
      %83 = sbr.rel (0) target = $region21
    $region20: #{tpu_custom_call.1} parent=1 // pred_region
      %s85 = ssub.s32 128, 128
      %86 = vsyncadd [#allocation4], %s85
      %s88 = sshll.u32 [#allocation5], 4
      %s89 = int_to_ptr.vmem [resolvable:$true] %s88
      %91 = dma.vmem_to_hbm [thread:$0]  %s89, 128, %s3, [#allocation4]
    $region21: #{tpu_custom_call.1} parent=1 // pred_fallthru
      _
    // Predicated region
    $region22: #{tpu_custom_call.1} parent=1 // pred_check
      _
    $region23: #{tpu_custom_call.1} parent=1 // pred_check_branch
      %93 = sbr.rel (0) target = $region25
    $region24: #{tpu_custom_call.1} parent=1 // pred_region
      %s95 = ssub.s32 16, 16
      %96 = vsyncadd [#allocation7], %s95
      %s98 = sshll.u32 [#allocation6], 4
      %s99 = int_to_ptr.vmem [resolvable:$true] %s98
      %101 = dma.vmem_to_hbm [thread:$0]  %s99, 16, %s4, [#allocation7]
    $region25: #{tpu_custom_call.1} parent=1 // pred_fallthru
      _
    // Predicated region
    $region26: #{tpu_custom_call.1} parent=1 // pred_check
      _
    $region27: #{tpu_custom_call.1} parent=1 // pred_check_branch
      %103 = sbr.rel (0) target = $region29
    $region28: #{tpu_custom_call.1} parent=1 // pred_region
      %104 = dma.done [#allocation4], 128
    $region29: #{tpu_custom_call.1} parent=1 // pred_fallthru
      _
    // Predicated region
    $region30: #{tpu_custom_call.1} parent=1 // pred_check
      _
    $region31: #{tpu_custom_call.1} parent=1 // pred_check_branch
      %106 = sbr.rel (0) target = $region33
    $region32: #{tpu_custom_call.1} parent=1 // pred_region
      %107 = dma.done [#allocation7], 16
    $region33: #{tpu_custom_call.1} parent=1 // pred_fallthru
      _
    %108 = vsyncpa [#allocation3], 1
    %109 = vsyncpa [#allocation4], 1
    %110 = vsyncpa [#allocation7], 1

</llo_original>
